<compile_context>
chip_gen: v6e
topology: v6e:2x2x1
jax: 0.10.0
libtpu: 0.0.40
codegen_flags: <defaults>
</compile_context>

<pallas_src>
import functools
import math

import jax
import jax.numpy as jnp
from jax.experimental import pallas as pl
from jax.experimental.pallas import tpu as pltpu

DROPOUT_P = 0.2


def _round_up(n, m):
    return ((n + m - 1) // m) * m


def _ffn_kernel(seed_ref, x_ref, w1_ref, b1_ref, w2_ref, b2_ref, o_ref, *,
                train: bool, dropout_p: float, h_chunk: int):
    """One (tm, C) row tile of  y = dropout(relu(x @ W1 + b1) @ W2 + b2)."""
    tm, C = o_ref.shape
    H = w1_ref.shape[1]

    # bf16 MXU operands, f32 accumulation. Weights already arrive as bf16.
    x = x_ref[...].astype(jnp.bfloat16)

    # Chunk the hidden dim so the (tm, 4C) f32 intermediate never lives whole:
    #   y = sum_k relu(x @ W1[:, k] + b1[k]) @ W2[k, :]
    y = jnp.zeros((tm, C), jnp.float32)
    for h0 in range(0, H, h_chunk):
        h = jnp.dot(x, w1_ref[:, h0:h0 + h_chunk],
                    preferred_element_type=jnp.float32)
        h = jnp.maximum(h + b1_ref[:, h0:h0 + h_chunk], 0.0)
        y = y + jnp.dot(h.astype(jnp.bfloat16), w2_ref[h0:h0 + h_chunk, :],
                        preferred_element_type=jnp.float32)
    y = y + b2_ref[...]

    if train and dropout_p > 0.0:
        # Inverted dropout (PyTorch training semantics: keep w.p. 1-p, scale by
        # 1/(1-p)). Stateless counter-hash RNG keyed on (seed, global row, col)
        # so the stream is independent of tiling. VPU-only integer ops.
        # TODO(synk): cannot bit-match torch's RNG stream; semantics match.
        seed = seed_ref[0].astype(jnp.uint32)
        row0 = (pl.program_id(0) * tm).astype(jnp.uint32)
        rows = jax.lax.broadcasted_iota(jnp.int32, (tm, C), 0).astype(jnp.uint32) + row0
        cols = jax.lax.broadcasted_iota(jnp.int32, (tm, C), 1).astype(jnp.uint32)
        z = (rows * jnp.uint32(0x9E3779B1)
             + cols * jnp.uint32(0x85EBCA77)
             + seed * jnp.uint32(0xC2B2AE3D))
        z = (z ^ (z >> jnp.uint32(16))) * jnp.uint32(0x7FEB352D)
        z = (z ^ (z >> jnp.uint32(15))) * jnp.uint32(0x846CA68B)
        z = z ^ (z >> jnp.uint32(16))
        # Uniform in [0, 1) from the top 24 bits (exact in f32, avoids any
        # signed/unsigned compare ambiguity).
        r = (z >> jnp.uint32(8)).astype(jnp.int32).astype(jnp.float32) * (1.0 / (1 << 24))
        keep = r >= jnp.float32(dropout_p)
        y = jnp.where(keep, y * (1.0 / (1.0 - dropout_p)), 0.0)

    o_ref[...] = y.astype(o_ref.dtype)


def feed_forward(x, w1, b1, w2, b2, *, train=False, seed=0, tm=256):
    """x: (B, T, C) float32. w1: (C, 4C), b1: (4C,), w2: (4C, C), b2: (C,)."""
    B, T, C = x.shape
    H = w1.shape[1]
    M = B * T

    # Row tile: largest multiple of 8 up to `tm`; pad M so the grid is exact.
    # (On v7x, keeping the grid length >= 2 lets both TensorCores work; for
    # large M with tm=256 this holds automatically.)
    tm = _round_up(min(tm, _round_up(M, 8)), 8)
    Mp = _round_up(M, tm)

    x2 = x.reshape(M, C)
    if Mp != M:
        x2 = jnp.pad(x2, ((0, Mp - M), (0, 0)))

    # bf16 weights: halves HBM->VMEM traffic, feeds the MXU bf16 path.
    w1b = w1.astype(jnp.bfloat16)
    w2b = w2.astype(jnp.bfloat16)
    b1_2 = b1.reshape(1, H).astype(jnp.float32)
    b2_2 = b2.reshape(1, C).astype(jnp.float32)
    seed_arr = jnp.array([seed], dtype=jnp.int32)

    # Hidden-dim chunk: multiple of 128, <= 512 when it divides H evenly.
    h_chunk = 512 if (H > 512 and H % 512 == 0) else H

    kernel = functools.partial(_ffn_kernel, train=train, dropout_p=DROPOUT_P,
                               h_chunk=h_chunk)

    # VMEM budget: resident bf16 weights (x2 for buffering) + double-buffered
    # f32 row tiles + compute scratch, with headroom; capped under v7x's 64 MiB.
    bytes_weights = 2 * (C * H + H * C)              # bf16 W1 + W2
    bytes_tiles = 2 * 2 * tm * C * 4                 # x + out, double-buffered
    bytes_scratch = tm * (h_chunk + 2 * C) * 4
    vmem_limit = int(min(60 * 1024 * 1024,
                         max(2 * bytes_weights + bytes_tiles + bytes_scratch
                             + 4 * 1024 * 1024,
                             16 * 1024 * 1024)))

    cost = pl.CostEstimate(
        flops=4 * Mp * C * H,                        # two matmuls
        transcendentals=0,
        bytes_accessed=Mp * C * 4 * 2 + bytes_weights + (H + C) * 4,
    )

    out = pl.pallas_call(
        kernel,
        out_shape=jax.ShapeDtypeStruct((Mp, C), x.dtype),
        grid_spec=pltpu.PrefetchScalarGridSpec(
            num_scalar_prefetch=1,                   # dropout seed -> SMEM
            grid=(Mp // tm,),
            in_specs=[
                pl.BlockSpec((tm, C), lambda i, s: (i, 0)),   # x rows
                pl.BlockSpec((C, H), lambda i, s: (0, 0)),    # W1 (bf16)
                pl.BlockSpec((1, H), lambda i, s: (0, 0)),    # b1
                pl.BlockSpec((H, C), lambda i, s: (0, 0)),    # W2 (bf16)
                pl.BlockSpec((1, C), lambda i, s: (0, 0)),    # b2
            ],
            out_specs=pl.BlockSpec((tm, C), lambda i, s: (i, 0)),
        ),
        compiler_params=pltpu.CompilerParams(
            dimension_semantics=("parallel",),
            vmem_limit_bytes=vmem_limit),
        cost_estimate=cost,
    )(seed_arr, x2, w1b, b1_2, w2b, b2_2)

    return out[:M].reshape(B, T, C)


def init_params(key, n_embd):
    """Deterministic init mimicking PyTorch nn.Linear default (uniform ±1/sqrt(fan_in))."""
    k1, k2, k3, k4 = jax.random.split(key, 4)
    hidden = 4 * n_embd
    lim1 = 1.0 / math.sqrt(n_embd)
    lim2 = 1.0 / math.sqrt(hidden)
    w1 = jax.random.uniform(k1, (n_embd, hidden), jnp.float32, -lim1, lim1)
    b1 = jax.random.uniform(k2, (hidden,), jnp.float32, -lim1, lim1)
    w2 = jax.random.uniform(k3, (hidden, n_embd), jnp.float32, -lim2, lim2)
    b2 = jax.random.uniform(k4, (n_embd,), jnp.float32, -lim2, lim2)
    return w1, b1, w2, b2


if __name__ == "__main__":
    # Small shapes consistent with the module: (batch, seq, n_embd).
    B, T, C = 2, 8, 128

    key = jax.random.PRNGKey(0)
    kx, kp = jax.random.split(key)
    x = jax.random.normal(kx, (B, T, C), dtype=jnp.float32)
    w1, b1, w2, b2 = init_params(kp, C)

    # Eval-mode forward (dropout is identity, matching module.eval()).
    y = jax.block_until_ready(feed_forward(x, w1, b1, w2, b2, train=False))

    # Pure-JAX reference using the same bf16-operand / f32-accumulate matmuls.
    xb = x.reshape(-1, C).astype(jnp.bfloat16)
    h = jnp.dot(xb, w1.astype(jnp.bfloat16), preferred_element_type=jnp.float32) + b1
    h = jnp.maximum(h, 0.0)
    ref = jnp.dot(h.astype(jnp.bfloat16), w2.astype(jnp.bfloat16),
                  preferred_element_type=jnp.float32) + b2
    ref = ref.reshape(B, T, C)
    assert jnp.allclose(y, ref, atol=2e-2, rtol=2e-2), "mismatch vs reference"

    # Training-mode dropout path (stateless in-kernel RNG).
    y_train = jax.block_until_ready(
        feed_forward(x, w1, b1, w2, b2, train=True, seed=123))
    assert y_train.shape == (B, T, C)
    assert bool(jnp.all(jnp.isfinite(y_train)))

    print("KERNEL_OK")
</pallas_src>

<mosaic_0001>
module attributes {stable_mosaic.version = 11 : i64} {
  func.func @_ffn_kernel(%arg0: i32, %arg1: memref<1xi32, #tpu.memory_space<smem>>, %arg2: memref<16x128xf32, #tpu.memory_space<vmem>>, %arg3: memref<128x512xbf16, #tpu.memory_space<vmem>>, %arg4: memref<1x512xf32, #tpu.memory_space<vmem>>, %arg5: memref<512x128xbf16, #tpu.memory_space<vmem>>, %arg6: memref<1x128xf32, #tpu.memory_space<vmem>>, %arg7: memref<16x128xf32, #tpu.memory_space<vmem>>) attributes {dimension_semantics = [#tpu.dimension_semantics<parallel>], iteration_bounds = array<i64: 1>, scalar_prefetch = 1 : i64, scratch_operands = 0 : i64, tpu.core_type = #tpu.core_type<tc>, window_params = [{transform_indices = @transform_0, window_bounds = array<i64: 16, 128>}, {pipeline_mode = #tpu.pipeline_mode<synchronous>, transform_indices = @transform_1, window_bounds = array<i64: 128, 512>}, {pipeline_mode = #tpu.pipeline_mode<synchronous>, transform_indices = @transform_2, window_bounds = array<i64: 1, 512>}, {pipeline_mode = #tpu.pipeline_mode<synchronous>, transform_indices = @transform_3, window_bounds = array<i64: 512, 128>}, {pipeline_mode = #tpu.pipeline_mode<synchronous>, transform_indices = @transform_4, window_bounds = array<i64: 1, 128>}, {transform_indices = @transform_5, window_bounds = array<i64: 16, 128>}]} {
    %c0 = arith.constant 0 : index
    %c0_0 = arith.constant 0 : index
    %0 = vector.load %arg2[%c0, %c0_0] : memref<16x128xf32, #tpu.memory_space<vmem>>, vector<16x128xf32>
    %1 = arith.truncf %0 : vector<16x128xf32> to vector<16x128xbf16>
    %cst = arith.constant 0.000000e+00 : f32
    %2 = vector.broadcast %cst : f32 to vector<16x128xf32>
    %c0_1 = arith.constant 0 : index
    %c0_2 = arith.constant 0 : index
    %3 = vector.load %arg3[%c0_1, %c0_2] : memref<128x512xbf16, #tpu.memory_space<vmem>>, vector<128x512xbf16>
    %cst_3 = arith.constant dense<0.000000e+00> : vector<16x512xf32>
    %4 = tpu.matmul %1, %3, %cst_3 {dimension_numbers = #tpu.dot_dimension_numbers<[1], [0], [0], [1], [0, 0, 1, 1], [], []>} : vector<16x128xbf16>, vector<128x512xbf16>, vector<16x512xf32> -> vector<16x512xf32>
    %c0_4 = arith.constant 0 : index
    %c0_5 = arith.constant 0 : index
    %5 = vector.load %arg4[%c0_4, %c0_5] : memref<1x512xf32, #tpu.memory_space<vmem>>, vector<1x512xf32>
    %6 = vector.broadcast %5 : vector<1x512xf32> to vector<16x512xf32>
    %7 = arith.addf %4, %6 : vector<16x512xf32>
    %cst_6 = arith.constant 0.000000e+00 : f32
    %8 = vector.broadcast %cst_6 : f32 to vector<16x512xf32>
    %9 = arith.maximumf %7, %8 : vector<16x512xf32>
    %10 = arith.truncf %9 : vector<16x512xf32> to vector<16x512xbf16>
    %c0_7 = arith.constant 0 : index
    %c0_8 = arith.constant 0 : index
    %11 = vector.load %arg5[%c0_7, %c0_8] : memref<512x128xbf16, #tpu.memory_space<vmem>>, vector<512x128xbf16>
    %cst_9 = arith.constant dense<0.000000e+00> : vector<16x128xf32>
    %12 = tpu.matmul %10, %11, %cst_9 {dimension_numbers = #tpu.dot_dimension_numbers<[1], [0], [0], [1], [0, 0, 1, 1], [], []>} : vector<16x512xbf16>, vector<512x128xbf16>, vector<16x128xf32> -> vector<16x128xf32>
    %13 = arith.addf %2, %12 : vector<16x128xf32>
    %c0_10 = arith.constant 0 : index
    %c0_11 = arith.constant 0 : index
    %14 = vector.load %arg6[%c0_10, %c0_11] : memref<1x128xf32, #tpu.memory_space<vmem>>, vector<1x128xf32>
    %15 = vector.broadcast %14 : vector<1x128xf32> to vector<16x128xf32>
    %16 = arith.addf %13, %15 : vector<16x128xf32>
    %c0_12 = arith.constant 0 : index
    %c0_13 = arith.constant 0 : index
    %17 = vector.load %arg7[%c0_12, %c0_13] : memref<16x128xf32, #tpu.memory_space<vmem>>, vector<16x128xf32>
    tpu.vector_store %arg7[%c0_12, %c0_13], %16 {strides = array<i32>} : memref<16x128xf32, #tpu.memory_space<vmem>>, vector<16x128xf32>,
    return
  }
  func.func @transform_0(%arg0: i32, %arg1: memref<1xi32, #tpu.memory_space<smem>>) -> (i32, i32) {
    %c0_i32 = arith.constant 0 : i32
    %c0_i32_0 = arith.constant 0 : i32
    return %arg0, %c0_i32 : i32, i32
  }
  func.func @transform_1(%arg0: i32, %arg1: memref<1xi32, #tpu.memory_space<smem>>) -> (i32, i32) {
    %c0_i32 = arith.constant 0 : i32
    %c0_i32_0 = arith.constant 0 : i32
    %c0_i32_1 = arith.constant 0 : i32
    return %c0_i32, %c0_i32_0 : i32, i32
  }
  func.func @transform_2(%arg0: i32, %arg1: memref<1xi32, #tpu.memory_space<smem>>) -> (i32, i32) {
    %c0_i32 = arith.constant 0 : i32
    %c0_i32_0 = arith.constant 0 : i32
    %c0_i32_1 = arith.constant 0 : i32
    return %c0_i32, %c0_i32_0 : i32, i32
  }
  func.func @transform_3(%arg0: i32, %arg1: memref<1xi32, #tpu.memory_space<smem>>) -> (i32, i32) {
    %c0_i32 = arith.constant 0 : i32
    %c0_i32_0 = arith.constant 0 : i32
    %c0_i32_1 = arith.constant 0 : i32
    return %c0_i32, %c0_i32_0 : i32, i32
  }
  func.func @transform_4(%arg0: i32, %arg1: memref<1xi32, #tpu.memory_space<smem>>) -> (i32, i32) {
    %c0_i32 = arith.constant 0 : i32
    %c0_i32_0 = arith.constant 0 : i32
    %c0_i32_1 = arith.constant 0 : i32
    return %c0_i32, %c0_i32_0 : i32, i32
  }
  func.func @transform_5(%arg0: i32, %arg1: memref<1xi32, #tpu.memory_space<smem>>) -> (i32, i32) {
    %c0_i32 = arith.constant 0 : i32
    %c0_i32_0 = arith.constant 0 : i32
    return %arg0, %c0_i32 : i32, i32
  }
}

</mosaic_0001>

<llo_original>
// kernel: tpu_custom_call.1
$region0: #{tpu_custom_call.1}
  #allocation0 [shape = 'u32[]', space=smem, size = 0x4, offset = 0x4, fixed_abs, tag = 'smem constant byte address 0x4 - core index']
  #allocation1 [shape = 'u32[144,128]{1,0:T(1,128)}', space=vmem, size = 0x12000, scoped, tag = 'internal scratch']
  #allocation2 [shape = 's32[1]{0}', space=sflag, size = 0x4, scoped, tag = 'scoped memory for tpu_custom_call.1']
  #allocation3 [shape = 's32[1]{0:T(128)S(6)}', space=smem, size = 0x200, scoped, tag = 'prefetched SMEM operand 0']
  %s0 = inlined_call_operand.<no memory space> [shape: s32[1], index: 0, kind: input, shape index: {}]
  %s1 = inlined_call_operand.hbm [shape: f32[16,128], index: 1, kind: input, shape index: {}]
  %s2 = inlined_call_operand.hbm [shape: bf16[128,512], index: 2, kind: input, shape index: {}]
  %s3 = inlined_call_operand.vmem [shape: f32[1,512], index: 3, kind: input, shape index: {}]
  %s4 = inlined_call_operand.hbm [shape: bf16[512,128], index: 4, kind: input, shape index: {}]
  %s5 = inlined_call_operand.vmem [shape: f32[1,128], index: 5, kind: input, shape index: {}]
  %s6 = inlined_call_operand.hbm [shape: f32[16,128], index: 6, kind: output, shape index: {}]
  %s7 = sld [smem:[#allocation0]]
  $region42: #{tpu_custom_call.1} parent=0
    _
  %s9 = ssub.s32 1, %s7
  %s10 = scalar_select 0, %s9, %s7
  %11 = sst [smem:[#allocation3]] %s0
  $region1: #{tpu_custom_call.1} parent=0
    #allocation4 [shape = 'u8[8192]{0}', space=vmem, size = 0x2000, scoped, tag = 'input window, operand 1, single buffered']
    #allocation5 [shape = 's32[1]{0}', space=sflag, size = 0x4, scoped, tag = 'scoped memory for tpu_custom_call.1']
    #allocation6 [shape = 's32[1]{0}', space=sflag, size = 0x4, scoped, tag = 'scoped memory for tpu_custom_call.1']
    #allocation7 [shape = 'u8[131072]{0}', space=vmem, size = 0x20000, scoped, tag = 'input window, operand 2, single buffered']
    #allocation8 [shape = 's32[1]{0}', space=sflag, size = 0x4, scoped, tag = 'scoped memory for tpu_custom_call.1']
    #allocation9 [shape = 'u8[131072]{0}', space=vmem, size = 0x20000, scoped, tag = 'input window, operand 4, single buffered']
    #allocation10 [shape = 'u8[8192]{0}', space=vmem, size = 0x2000, scoped, tag = 'output window, operand 0, single buffered']
    %12 = vsyncpa [#allocation5], 0
    %13 = vsyncpa [#allocation8], 0
    %14 = vsyncpa [#allocation6], 0
    // Predicated region
    $region2: #{tpu_custom_call.1} parent=1 // pred_check
      _
    $region3: #{tpu_custom_call.1} parent=1 // pred_check_branch
      %16 = sbr.rel (0) target = $region5
    $region4: #{tpu_custom_call.1} parent=1 // pred_region
      %s18 = ssub.s32 256, 256
      %19 = vsyncadd [#allocation5], %s18
      %s20 = sshll.u32 [#allocation4], 4
      %s21 = int_to_ptr.vmem [resolvable:$true] %s20
      %26 = dma.hbm_to_vmem [thread:$0]  %s1, 256, %s21, [#allocation5], 128, 128, 8
    $region5: #{tpu_custom_call.1} parent=1 // pred_fallthru
      _
    // Predicated region
    $region6: #{tpu_custom_call.1} parent=1 // pred_check
      _
    $region7: #{tpu_custom_call.1} parent=1 // pred_check_branch
      %28 = sbr.rel (0) target = $region9
    $region8: #{tpu_custom_call.1} parent=1 // pred_region
      %s30 = ssub.s32 4096, 4096
      %31 = vsyncadd [#allocation8], %s30
      %s32 = sshll.u32 [#allocation7], 4
      %s33 = int_to_ptr.vmem [resolvable:$true] %s32
      %38 = dma.hbm_to_vmem [thread:$0]  %s2, 4096, %s33, [#allocation8], 256, 256, 16
    $region9: #{tpu_custom_call.1} parent=1 // pred_fallthru
      _
    // Predicated region
    $region10: #{tpu_custom_call.1} parent=1 // pred_check
      _
    $region11: #{tpu_custom_call.1} parent=1 // pred_check_branch
      %40 = sbr.rel (0) target = $region13
    $region12: #{tpu_custom_call.1} parent=1 // pred_region
      _
    $region13: #{tpu_custom_call.1} parent=1 // pred_fallthru
      _
    // Predicated region
    $region14: #{tpu_custom_call.1} parent=1 // pred_check
      _
    $region15: #{tpu_custom_call.1} parent=1 // pred_check_branch
      %42 = sbr.rel (0) target = $region17
    $region16: #{tpu_custom_call.1} parent=1 // pred_region
      %s44 = ssub.s32 4096, 4096
      %45 = vsyncadd [#allocation8], %s44
      %s46 = sshll.u32 [#allocation9], 4
      %s47 = int_to_ptr.vmem [resolvable:$true] %s46
      %52 = dma.hbm_to_vmem [thread:$0]  %s4, 4096, %s47, [#allocation8], 64, 64, 4
    $region17: #{tpu_custom_call.1} parent=1 // pred_fallthru
      _
    // Predicated region
    $region18: #{tpu_custom_call.1} parent=1 // pred_check
      _
    $region19: #{tpu_custom_call.1} parent=1 // pred_check_branch
      %54 = sbr.rel (0) target = $region21
    $region20: #{tpu_custom_call.1} parent=1 // pred_region
      _
    $region21: #{tpu_custom_call.1} parent=1 // pred_fallthru
      _
    // Predicated region
    $region22: #{tpu_custom_call.1} parent=1 // pred_check
      _
    $region23: #{tpu_custom_call.1} parent=1 // pred_check_branch
      %56 = sbr.rel (0) target = $region25
    $region24: #{tpu_custom_call.1} parent=1 // pred_region
      %57 = dma.done [#allocation5], 256
    $region25: #{tpu_custom_call.1} parent=1 // pred_fallthru
      _
    // Predicated region
    $region26: #{tpu_custom_call.1} parent=1 // pred_check
      _
    $region27: #{tpu_custom_call.1} parent=1 // pred_check_branch
      %59 = sbr.rel (0) target = $region29
    $region28: #{tpu_custom_call.1} parent=1 // pred_region
      %60 = dma.done [#allocation8], 4096
    $region29: #{tpu_custom_call.1} parent=1 // pred_fallthru
      _
    // Predicated region
    $region30: #{tpu_custom_call.1} parent=1 // pred_check
      _
    $region31: #{tpu_custom_call.1} parent=1 // pred_check_branch
      %62 = sbr.rel (0) target = $region33
    $region32: #{tpu_custom_call.1} parent=1 // pred_region
      %63 = dma.done [#allocation8], 4096
    $region33: #{tpu_custom_call.1} parent=1 // pred_fallthru
      _
    %v65 = vld [vmem:[#allocation4] sm:$0xff]
    %v66 = vld [vmem:[#allocation4 + $0x8] sm:$0xff]
    %v67 = vpack.c.bf16 %v66, %v65
    %v68 = vld [vmem:[#allocation7] sm:$0xff]
    %v69 = vld [vmem:[#allocation7 + $0x8] sm:$0xff]
    %v70 = vld [vmem:[#allocation7 + $0x10] sm:$0xff]
    %v71 = vld [vmem:[#allocation7 + $0x18] sm:$0xff]
    %v72 = vld [vmem:[#allocation7 + $0x20] sm:$0xff]
    %v73 = vld [vmem:[#allocation7 + $0x28] sm:$0xff]
    %v74 = vld [vmem:[#allocation7 + $0x30] sm:$0xff]
    %v75 = vld [vmem:[#allocation7 + $0x38] sm:$0xff]
    %v76 = vld [vmem:[#allocation7 + $0x40] sm:$0xff]
    %v77 = vld [vmem:[#allocation7 + $0x48] sm:$0xff]
    %v78 = vld [vmem:[#allocation7 + $0x50] sm:$0xff]
    %v79 = vld [vmem:[#allocation7 + $0x58] sm:$0xff]
    %v80 = vld [vmem:[#allocation7 + $0x60] sm:$0xff]
    %v81 = vld [vmem:[#allocation7 + $0x68] sm:$0xff]
    %v82 = vld [vmem:[#allocation7 + $0x70] sm:$0xff]
    %v83 = vld [vmem:[#allocation7 + $0x78] sm:$0xff]
    %v84 = vld [vmem:[#allocation7 + $0x80] sm:$0xff]
    %v85 = vld [vmem:[#allocation7 + $0x88] sm:$0xff]
    %v86 = vld [vmem:[#allocation7 + $0x90] sm:$0xff]
    %v87 = vld [vmem:[#allocation7 + $0x98] sm:$0xff]
    %v88 = vld [vmem:[#allocation7 + $0xa0] sm:$0xff]
    %v89 = vld [vmem:[#allocation7 + $0xa8] sm:$0xff]
    %v90 = vld [vmem:[#allocation7 + $0xb0] sm:$0xff]
    %v91 = vld [vmem:[#allocation7 + $0xb8] sm:$0xff]
    %v92 = vld [vmem:[#allocation7 + $0xc0] sm:$0xff]
    %v93 = vld [vmem:[#allocation7 + $0xc8] sm:$0xff]
    %v94 = vld [vmem:[#allocation7 + $0xd0] sm:$0xff]
    %v95 = vld [vmem:[#allocation7 + $0xd8] sm:$0xff]
    %v96 = vld [vmem:[#allocation7 + $0xe0] sm:$0xff]
    %v97 = vld [vmem:[#allocation7 + $0xe8] sm:$0xff]
    %v98 = vld [vmem:[#allocation7 + $0xf0] sm:$0xff]
    %v99 = vld [vmem:[#allocation7 + $0xf8] sm:$0xff]
    %v100 = vld [vmem:[%s3] sm:$0xf]
    %v102 = vlaneseq
    %v103 = vshrl.u32 %v102, 7
    %v104 = vsub.s32 0, %v103
    %v105 = vrot.slane %v100, %v104
    %v106 = vlaneseq
    %v107 = vshrl.u32 %v106, 7
    %v108 = vsub.s32 1, %v107
    %v109 = vrot.slane %v100, %v108
    %v110 = vlaneseq
    %v111 = vshrl.u32 %v110, 7
    %v112 = vsub.s32 2, %v111
    %v113 = vrot.slane %v100, %v112
    %v114 = vlaneseq
    %v115 = vshrl.u32 %v114, 7
    %v116 = vsub.s32 3, %v115
    %v117 = vrot.slane %v100, %v116
    %v154 = vunpack.c.l.b16 %v68
    %v155 = vunpack.c.h.b16 %v68
    %v156 = vunpack.c.l.b16 %v69
    %v157 = vunpack.c.h.b16 %v69
    %v158 = vunpack.c.l.b16 %v70
    %v159 = vunpack.c.h.b16 %v70
    %v160 = vunpack.c.l.b16 %v71
    %v161 = vunpack.c.h.b16 %v71
    %v162 = vunpack.c.l.b16 %v72
    %v163 = vunpack.c.h.b16 %v72
    %v164 = vunpack.c.l.b16 %v73
    %v165 = vunpack.c.h.b16 %v73
    %v166 = vunpack.c.l.b16 %v74
    %v167 = vunpack.c.h.b16 %v74
    %v168 = vunpack.c.l.b16 %v75
    %v169 = vunpack.c.h.b16 %v75
    %v170 = vunpack.c.l.b16 %v76
    %v171 = vunpack.c.h.b16 %v76
    %v172 = vunpack.c.l.b16 %v77
    %v173 = vunpack.c.h.b16 %v77
    %v174 = vunpack.c.l.b16 %v78
    %v175 = vunpack.c.h.b16 %v78
    %v176 = vunpack.c.l.b16 %v79
    %v177 = vunpack.c.h.b16 %v79
    %v178 = vunpack.c.l.b16 %v80
    %v179 = vunpack.c.h.b16 %v80
    %v180 = vunpack.c.l.b16 %v81
    %v181 = vunpack.c.h.b16 %v81
    %v182 = vunpack.c.l.b16 %v82
    %v183 = vunpack.c.h.b16 %v82
    %v184 = vunpack.c.l.b16 %v83
    %v185 = vunpack.c.h.b16 %v83
    %v186 = vunpack.c.l.b16 %v84
    %v187 = vunpack.c.h.b16 %v84
    %v188 = vunpack.c.l.b16 %v85
    %v189 = vunpack.c.h.b16 %v85
    %v190 = vunpack.c.l.b16 %v86
    %v191 = vunpack.c.h.b16 %v86
    %v192 = vunpack.c.l.b16 %v87
    %v193 = vunpack.c.h.b16 %v87
    %v194 = vunpack.c.l.b16 %v88
    %v195 = vunpack.c.h.b16 %v88
    %v196 = vunpack.c.l.b16 %v89
    %v197 = vunpack.c.h.b16 %v89
    %v198 = vunpack.c.l.b16 %v90
    %v199 = vunpack.c.h.b16 %v90
    %v200 = vunpack.c.l.b16 %v91
    %v201 = vunpack.c.h.b16 %v91
    %v202 = vunpack.c.l.b16 %v92
    %v203 = vunpack.c.h.b16 %v92
    %v204 = vunpack.c.l.b16 %v93
    %v205 = vunpack.c.h.b16 %v93
    %v206 = vunpack.c.l.b16 %v94
    %v207 = vunpack.c.h.b16 %v94
    %v208 = vunpack.c.l.b16 %v95
    %v209 = vunpack.c.h.b16 %v95
    %v210 = vunpack.c.l.b16 %v96
    %v211 = vunpack.c.h.b16 %v96
    %v212 = vunpack.c.l.b16 %v97
    %v213 = vunpack.c.h.b16 %v97
    %v214 = vunpack.c.l.b16 %v98
    %v215 = vunpack.c.h.b16 %v98
    %v216 = vunpack.c.l.b16 %v99
    %v217 = vunpack.c.h.b16 %v99
    %v218 = vpack.c.b16 %v158, %v154
    %v219 = vpack.c.b16 %v159, %v155
    %v220 = vpack.c.b16 %v160, %v156
    %v221 = vpack.c.b16 %v161, %v157
    %v222 = vpack.c.b16 %v166, %v162
    %v223 = vpack.c.b16 %v167, %v163
    %v224 = vpack.c.b16 %v168, %v164
    %v225 = vpack.c.b16 %v169, %v165
    %v226 = vpack.c.b16 %v174, %v170
    %v227 = vpack.c.b16 %v175, %v171
    %v228 = vpack.c.b16 %v176, %v172
    %v229 = vpack.c.b16 %v177, %v173
    %v230 = vpack.c.b16 %v182, %v178
    %v231 = vpack.c.b16 %v183, %v179
    %v232 = vpack.c.b16 %v184, %v180
    %v233 = vpack.c.b16 %v185, %v181
    %v234 = vpack.c.b16 %v190, %v186
    %v235 = vpack.c.b16 %v191, %v187
    %v236 = vpack.c.b16 %v192, %v188
    %v237 = vpack.c.b16 %v193, %v189
    %v238 = vpack.c.b16 %v198, %v194
    %v239 = vpack.c.b16 %v199, %v195
    %v240 = vpack.c.b16 %v200, %v196
    %v241 = vpack.c.b16 %v201, %v197
    %v242 = vpack.c.b16 %v206, %v202
    %v243 = vpack.c.b16 %v207, %v203
    %v244 = vpack.c.b16 %v208, %v204
    %v245 = vpack.c.b16 %v209, %v205
    %v246 = vpack.c.b16 %v214, %v210
    %v247 = vpack.c.b16 %v215, %v211
    %v248 = vpack.c.b16 %v216, %v212
    %v249 = vpack.c.b16 %v217, %v213
    %282 = vmatprep.subr.bf16.mxu0 %v247
    %283 = vmatpush1.bf16.msra.mxu0 %v246
    %284 = vmatprep.subr.bf16.mxu0 %v243
    %285 = vmatpush1.bf16.msra.mxu0 %v242
    %286 = vmatprep.subr.bf16.mxu0 %v239
    %287 = vmatpush1.bf16.msra.mxu0 %v238
    %288 = vmatprep.subr.bf16.mxu0 %v235
    %289 = vmatpush1.bf16.msra.mxu0 %v234
    %290 = vmatprep.subr.bf16.mxu0 %v231
    %291 = vmatpush1.bf16.msra.mxu0 %v230
    %292 = vmatprep.subr.bf16.mxu0 %v227
    %293 = vmatpush1.bf16.msra.mxu0 %v226
    %294 = vmatprep.subr.bf16.mxu0 %v223
    %295 = vmatpush1.bf16.msra.mxu0 %v222
    %296 = vmatprep.subr.bf16.mxu0 %v219
    %297 = vmatpush1.bf16.msra.mxu0 %v218
    %298 = vmatprep.subr.bf16.mxu0 0
    %299 = vmatpush2.bf16.msra.mxu0 0
    %300 = vmatprep.subr.bf16.mxu0 0
    %301 = vmatpush2.bf16.msra.mxu0 0
    %302 = vmatprep.subr.bf16.mxu0 0
    %303 = vmatpush2.bf16.msra.mxu0 0
    %304 = vmatprep.subr.bf16.mxu0 0
    %305 = vmatpush2.bf16.msra.mxu0 0
    %306 = vmatprep.subr.bf16.mxu0 0
    %307 = vmatpush2.bf16.msra.mxu0 0
    %308 = vmatprep.subr.bf16.mxu0 0
    %309 = vmatpush2.bf16.msra.mxu0 0
    %310 = vmatprep.subr.bf16.mxu0 0
    %311 = vmatpush2.bf16.msra.mxu0 0
    %312 = vmatprep.subr.bf16.mxu0 0
    %313 = vmatpush2.bf16.msra.mxu0 0
    %314 = vmatprep.mubr.bf16.mxu0 0
    %315 = vmatmul.mubr.bf16.gmra.mxu0 %v67
    %v316 = vpop.f32.mrf.mxu0
    %v317 = vadd.f32 %v105, %v316
    %v318 = vpop.f32.mrf.mxu0
    %v319 = vadd.f32 %v109, %v318
    %v320 = vpop.f32.mrf.mxu0
    %v321 = vadd.f32 %v105, %v320
    %v322 = vpop.f32.mrf.mxu0
    %v323 = vadd.f32 %v109, %v322
    %324 = vdwg.mxu0
    %325 = vmatprep.subr.bf16.mxu0 %v249
    %326 = vmatpush1.bf16.msra.mxu0 %v248
    %327 = vmatprep.subr.bf16.mxu0 %v245
    %328 = vmatpush1.bf16.msra.mxu0 %v244
    %329 = vmatprep.subr.bf16.mxu0 %v241
    %330 = vmatpush1.bf16.msra.mxu0 %v240
    %331 = vmatprep.subr.bf16.mxu0 %v237
    %332 = vmatpush1.bf16.msra.mxu0 %v236
    %333 = vmatprep.subr.bf16.mxu0 %v233
    %334 = vmatpush1.bf16.msra.mxu0 %v232
    %335 = vmatprep.subr.bf16.mxu0 %v229
    %336 = vmatpush1.bf16.msra.mxu0 %v228
    %337 = vmatprep.subr.bf16.mxu0 %v225
    %338 = vmatpush1.bf16.msra.mxu0 %v224
    %339 = vmatprep.subr.bf16.mxu0 %v221
    %340 = vmatpush1.bf16.msra.mxu0 %v220
    %341 = vmatprep.subr.bf16.mxu0 0
    %342 = vmatpush2.bf16.msra.mxu0 0
    %343 = vmatprep.subr.bf16.mxu0 0
    %344 = vmatpush2.bf16.msra.mxu0 0
    %345 = vmatprep.subr.bf16.mxu0 0
    %346 = vmatpush2.bf16.msra.mxu0 0
    %347 = vmatprep.subr.bf16.mxu0 0
    %348 = vmatpush2.bf16.msra.mxu0 0
    %349 = vmatprep.subr.bf16.mxu0 0
    %350 = vmatpush2.bf16.msra.mxu0 0
    %351 = vmatprep.subr.bf16.mxu0 0
    %352 = vmatpush2.bf16.msra.mxu0 0
    %353 = vmatprep.subr.bf16.mxu0 0
    %354 = vmatpush2.bf16.msra.mxu0 0
    %355 = vmatprep.subr.bf16.mxu0 0
    %356 = vmatpush2.bf16.msra.mxu0 0
    %357 = vmatprep.mubr.bf16.mxu0 0
    %358 = vmatmul.mubr.bf16.gmra.mxu0 %v67
    %v359 = vpop.f32.mrf.mxu0
    %v360 = vadd.f32 %v113, %v359
    %v361 = vpop.f32.mrf.mxu0
    %v362 = vadd.f32 %v117, %v361
    %v363 = vpop.f32.mrf.mxu0
    %v364 = vadd.f32 %v113, %v363
    %v365 = vpop.f32.mrf.mxu0
    %v366 = vadd.f32 %v117, %v365
    %367 = vdwg.mxu0
    %v368 = vmax.f32 %v317, 0.0
    %v369 = vmax.f32 %v319, 0.0
    %v370 = vmax.f32 %v360, 0.0
    %v371 = vmax.f32 %v362, 0.0
    %v372 = vmax.f32 %v321, 0.0
    %v373 = vmax.f32 %v323, 0.0
    %v374 = vmax.f32 %v364, 0.0
    %v375 = vmax.f32 %v366, 0.0
    %v376 = vpack.c.bf16 %v372, %v368
    %v377 = vpack.c.bf16 %v373, %v369
    %v378 = vpack.c.bf16 %v374, %v370
    %v379 = vpack.c.bf16 %v375, %v371
    %v380 = vld [vmem:[#allocation9] sm:$0xf]
    %v381 = vld [vmem:[#allocation9 + $0x4] sm:$0xf]
    %v382 = vld [vmem:[#allocation9 + $0x8] sm:$0xf]
    %v383 = vld [vmem:[#allocation9 + $0xc] sm:$0xf]
    %v384 = vld [vmem:[#allocation9 + $0x10] sm:$0xf]
    %v385 = vld [vmem:[#allocation9 + $0x14] sm:$0xf]
    %v386 = vld [vmem:[#allocation9 + $0x18] sm:$0xf]
    %v387 = vld [vmem:[#allocation9 + $0x1c] sm:$0xf]
    %v388 = vld [vmem:[#allocation9 + $0x20] sm:$0xf]
    %v389 = vld [vmem:[#allocation9 + $0x24] sm:$0xf]
    %v390 = vld [vmem:[#allocation9 + $0x28] sm:$0xf]
    %v391 = vld [vmem:[#allocation9 + $0x2c] sm:$0xf]
    %v392 = vld [vmem:[#allocation9 + $0x30] sm:$0xf]
    %v393 = vld [vmem:[#allocation9 + $0x34] sm:$0xf]
    %v394 = vld [vmem:[#allocation9 + $0x38] sm:$0xf]
    %v395 = vld [vmem:[#allocation9 + $0x3c] sm:$0xf]
    %v396 = vld [vmem:[#allocation9 + $0x40] sm:$0xf]
    %v397 = vld [vmem:[#allocation9 + $0x44] sm:$0xf]
    %v398 = vld [vmem:[#allocation9 + $0x48] sm:$0xf]
    %v399 = vld [vmem:[#allocation9 + $0x4c] sm:$0xf]
    %v400 = vld [vmem:[#allocation9 + $0x50] sm:$0xf]
    %v401 = vld [vmem:[#allocation9 + $0x54] sm:$0xf]
    %v402 = vld [vmem:[#allocation9 + $0x58] sm:$0xf]
    %v403 = vld [vmem:[#allocation9 + $0x5c] sm:$0xf]
    %v404 = vld [vmem:[#allocation9 + $0x60] sm:$0xf]
    %v405 = vld [vmem:[#allocation9 + $0x64] sm:$0xf]
    %v406 = vld [vmem:[#allocation9 + $0x68] sm:$0xf]
    %v407 = vld [vmem:[#allocation9 + $0x6c] sm:$0xf]
    %v408 = vld [vmem:[#allocation9 + $0x70] sm:$0xf]
    %v409 = vld [vmem:[#allocation9 + $0x74] sm:$0xf]
    %v410 = vld [vmem:[#allocation9 + $0x78] sm:$0xf]
    %v411 = vld [vmem:[#allocation9 + $0x7c] sm:$0xf]
    %v412 = vld [vmem:[#allocation9 + $0x80] sm:$0xf]
    %v413 = vld [vmem:[#allocation9 + $0x84] sm:$0xf]
    %v414 = vld [vmem:[#allocation9 + $0x88] sm:$0xf]
    %v415 = vld [vmem:[#allocation9 + $0x8c] sm:$0xf]
    %v416 = vld [vmem:[#allocation9 + $0x90] sm:$0xf]
    %v417 = vld [vmem:[#allocation9 + $0x94] sm:$0xf]
    %v418 = vld [vmem:[#allocation9 + $0x98] sm:$0xf]
    %v419 = vld [vmem:[#allocation9 + $0x9c] sm:$0xf]
    %v420 = vld [vmem:[#allocation9 + $0xa0] sm:$0xf]
    %v421 = vld [vmem:[#allocation9 + $0xa4] sm:$0xf]
    %v422 = vld [vmem:[#allocation9 + $0xa8] sm:$0xf]
    %v423 = vld [vmem:[#allocation9 + $0xac] sm:$0xf]
    %v424 = vld [vmem:[#allocation9 + $0xb0] sm:$0xf]
    %v425 = vld [vmem:[#allocation9 + $0xb4] sm:$0xf]
    %v426 = vld [vmem:[#allocation9 + $0xb8] sm:$0xf]
    %v427 = vld [vmem:[#allocation9 + $0xbc] sm:$0xf]
    %v428 = vld [vmem:[#allocation9 + $0xc0] sm:$0xf]
    %v429 = vld [vmem:[#allocation9 + $0xc4] sm:$0xf]
    %v430 = vld [vmem:[#allocation9 + $0xc8] sm:$0xf]
    %v431 = vld [vmem:[#allocation9 + $0xcc] sm:$0xf]
    %v432 = vld [vmem:[#allocation9 + $0xd0] sm:$0xf]
    %v433 = vld [vmem:[#allocation9 + $0xd4] sm:$0xf]
    %v434 = vld [vmem:[#allocation9 + $0xd8] sm:$0xf]
    %v435 = vld [vmem:[#allocation9 + $0xdc] sm:$0xf]
    %v436 = vld [vmem:[#allocation9 + $0xe0] sm:$0xf]
    %v437 = vld [vmem:[#allocation9 + $0xe4] sm:$0xf]
    %v438 = vld [vmem:[#allocation9 + $0xe8] sm:$0xf]
    %v439 = vld [vmem:[#allocation9 + $0xec] sm:$0xf]
    %v440 = vld [vmem:[#allocation9 + $0xf0] sm:$0xf]
    %v441 = vld [vmem:[#allocation9 + $0xf4] sm:$0xf]
    %v442 = vld [vmem:[#allocation9 + $0xf8] sm:$0xf]
    %v443 = vld [vmem:[#allocation9 + $0xfc] sm:$0xf]
    %v444 = vld [vmem:[%s5] sm:$0x1]
    %v446 = vlaneseq
    %v447 = vshrl.u32 %v446, 7
    %v448 = vsub.s32 0, %v447
    %v449 = vrot.slane %v444, %v448
    %v515 = vunpack.c.l.b16 %v380
    %v516 = vunpack.c.l.b16 %v381
    %v517 = vunpack.c.l.b16 %v382
    %v518 = vunpack.c.l.b16 %v383
    %v519 = vunpack.c.l.b16 %v384
    %v520 = vunpack.c.l.b16 %v385
    %v521 = vunpack.c.l.b16 %v386
    %v522 = vunpack.c.l.b16 %v387
    %v523 = vunpack.c.l.b16 %v388
    %v524 = vunpack.c.l.b16 %v389
    %v525 = vunpack.c.l.b16 %v390
    %v526 = vunpack.c.l.b16 %v391
    %v527 = vunpack.c.l.b16 %v392
    %v528 = vunpack.c.l.b16 %v393
    %v529 = vunpack.c.l.b16 %v394
    %v530 = vunpack.c.l.b16 %v395
    %v531 = vunpack.c.l.b16 %v396
    %v532 = vunpack.c.l.b16 %v397
    %v533 = vunpack.c.l.b16 %v398
    %v534 = vunpack.c.l.b16 %v399
    %v535 = vunpack.c.l.b16 %v400
    %v536 = vunpack.c.l.b16 %v401
    %v537 = vunpack.c.l.b16 %v402
    %v538 = vunpack.c.l.b16 %v403
    %v539 = vunpack.c.l.b16 %v404
    %v540 = vunpack.c.l.b16 %v405
    %v541 = vunpack.c.l.b16 %v406
    %v542 = vunpack.c.l.b16 %v407
    %v543 = vunpack.c.l.b16 %v408
    %v544 = vunpack.c.l.b16 %v409
    %v545 = vunpack.c.l.b16 %v410
    %v546 = vunpack.c.l.b16 %v411
    %v547 = vunpack.c.l.b16 %v412
    %v548 = vunpack.c.l.b16 %v413
    %v549 = vunpack.c.l.b16 %v414
    %v550 = vunpack.c.l.b16 %v415
    %v551 = vunpack.c.l.b16 %v416
    %v552 = vunpack.c.l.b16 %v417
    %v553 = vunpack.c.l.b16 %v418
    %v554 = vunpack.c.l.b16 %v419
    %v555 = vunpack.c.l.b16 %v420
    %v556 = vunpack.c.l.b16 %v421
    %v557 = vunpack.c.l.b16 %v422
    %v558 = vunpack.c.l.b16 %v423
    %v559 = vunpack.c.l.b16 %v424
    %v560 = vunpack.c.l.b16 %v425
    %v561 = vunpack.c.l.b16 %v426
    %v562 = vunpack.c.l.b16 %v427
    %v563 = vunpack.c.l.b16 %v428
    %v564 = vunpack.c.l.b16 %v429
    %v565 = vunpack.c.l.b16 %v430
    %v566 = vunpack.c.l.b16 %v431
    %v567 = vunpack.c.l.b16 %v432
    %v568 = vunpack.c.l.b16 %v433
    %v569 = vunpack.c.l.b16 %v434
    %v570 = vunpack.c.l.b16 %v435
    %v571 = vunpack.c.l.b16 %v436
    %v572 = vunpack.c.l.b16 %v437
    %v573 = vunpack.c.l.b16 %v438
    %v574 = vunpack.c.l.b16 %v439
    %v575 = vunpack.c.l.b16 %v440
    %v576 = vunpack.c.l.b16 %v441
    %v577 = vunpack.c.l.b16 %v442
    %v578 = vunpack.c.l.b16 %v443
    %v579 = vpack.c.b16 %v516, %v515
    %v580 = vpack.c.b16 %v518, %v517
    %v581 = vpack.c.b16 %v520, %v519
    %v582 = vpack.c.b16 %v522, %v521
    %v583 = vpack.c.b16 %v524, %v523
    %v584 = vpack.c.b16 %v526, %v525
    %v585 = vpack.c.b16 %v528, %v527
    %v586 = vpack.c.b16 %v530, %v529
    %v587 = vpack.c.b16 %v532, %v531
    %v588 = vpack.c.b16 %v534, %v533
    %v589 = vpack.c.b16 %v536, %v535
    %v590 = vpack.c.b16 %v538, %v537
    %v591 = vpack.c.b16 %v540, %v539
    %v592 = vpack.c.b16 %v542, %v541
    %v593 = vpack.c.b16 %v544, %v543
    %v594 = vpack.c.b16 %v546, %v545
    %v595 = vpack.c.b16 %v548, %v547
    %v596 = vpack.c.b16 %v550, %v549
    %v597 = vpack.c.b16 %v552, %v551
    %v598 = vpack.c.b16 %v554, %v553
    %v599 = vpack.c.b16 %v556, %v555
    %v600 = vpack.c.b16 %v558, %v557
    %v601 = vpack.c.b16 %v560, %v559
    %v602 = vpack.c.b16 %v562, %v561
    %v603 = vpack.c.b16 %v564, %v563
    %v604 = vpack.c.b16 %v566, %v565
    %v605 = vpack.c.b16 %v568, %v567
    %v606 = vpack.c.b16 %v570, %v569
    %v607 = vpack.c.b16 %v572, %v571
    %v608 = vpack.c.b16 %v574, %v573
    %v609 = vpack.c.b16 %v576, %v575
    %v610 = vpack.c.b16 %v578, %v577
    %643 = vmatprep.subr.bf16.mxu0 0
    %644 = vmatpush1.bf16.msra.mxu0 %v586
    %645 = vmatprep.subr.bf16.mxu0 0
    %646 = vmatpush1.bf16.msra.mxu0 %v585
    %647 = vmatprep.subr.bf16.mxu0 0
    %648 = vmatpush1.bf16.msra.mxu0 %v584
    %649 = vmatprep.subr.bf16.mxu0 0
    %650 = vmatpush1.bf16.msra.mxu0 %v583
    %651 = vmatprep.subr.bf16.mxu0 0
    %652 = vmatpush1.bf16.msra.mxu0 %v582
    %653 = vmatprep.subr.bf16.mxu0 0
    %654 = vmatpush1.bf16.msra.mxu0 %v581
    %655 = vmatprep.subr.bf16.mxu0 0
    %656 = vmatpush1.bf16.msra.mxu0 %v580
    %657 = vmatprep.subr.bf16.mxu0 0
    %658 = vmatpush1.bf16.msra.mxu0 %v579
    %659 = vmatprep.subr.bf16.mxu0 0
    %660 = vmatpush2.bf16.msra.mxu0 %v594
    %661 = vmatprep.subr.bf16.mxu0 0
    %662 = vmatpush2.bf16.msra.mxu0 %v593
    %663 = vmatprep.subr.bf16.mxu0 0
    %664 = vmatpush2.bf16.msra.mxu0 %v592
    %665 = vmatprep.subr.bf16.mxu0 0
    %666 = vmatpush2.bf16.msra.mxu0 %v591
    %667 = vmatprep.subr.bf16.mxu0 0
    %668 = vmatpush2.bf16.msra.mxu0 %v590
    %669 = vmatprep.subr.bf16.mxu0 0
    %670 = vmatpush2.bf16.msra.mxu0 %v589
    %671 = vmatprep.subr.bf16.mxu0 0
    %672 = vmatpush2.bf16.msra.mxu0 %v588
    %673 = vmatprep.subr.bf16.mxu0 0
    %674 = vmatpush2.bf16.msra.mxu0 %v587
    %675 = vmatprep.mubr.bf16.mxu0 %v377
    %676 = vmatmul.mubr.bf16.gmra.mxu0 %v376
    %v677 = vpop.f32.mrf.mxu0
    %v678 = vadd.f32 %v449, %v677
    %v679 = vpop.f32.mrf.mxu0
    %v680 = vpop.f32.mrf.mxu0
    %v681 = vadd.f32 %v449, %v680
    %v682 = vpop.f32.mrf.mxu0
    %683 = vdwg.mxu0
    %684 = vmatprep.subr.bf16.mxu0 0
    %685 = vmatpush1.bf16.msra.mxu0 %v602
    %686 = vmatprep.subr.bf16.mxu0 0
    %687 = vmatpush1.bf16.msra.mxu0 %v601
    %688 = vmatprep.subr.bf16.mxu0 0
    %689 = vmatpush1.bf16.msra.mxu0 %v600
    %690 = vmatprep.subr.bf16.mxu0 0
    %691 = vmatpush1.bf16.msra.mxu0 %v599
    %692 = vmatprep.subr.bf16.mxu0 0
    %693 = vmatpush1.bf16.msra.mxu0 %v598
    %694 = vmatprep.subr.bf16.mxu0 0
    %695 = vmatpush1.bf16.msra.mxu0 %v597
    %696 = vmatprep.subr.bf16.mxu0 0
    %697 = vmatpush1.bf16.msra.mxu0 %v596
    %698 = vmatprep.subr.bf16.mxu0 0
    %699 = vmatpush1.bf16.msra.mxu0 %v595
    %700 = vmatprep.subr.bf16.mxu0 0
    %701 = vmatpush2.bf16.msra.mxu0 %v610
    %702 = vmatprep.subr.bf16.mxu0 0
    %703 = vmatpush2.bf16.msra.mxu0 %v609
    %704 = vmatprep.subr.bf16.mxu0 0
    %705 = vmatpush2.bf16.msra.mxu0 %v608
    %706 = vmatprep.subr.bf16.mxu0 0
    %707 = vmatpush2.bf16.msra.mxu0 %v607
    %708 = vmatprep.subr.bf16.mxu0 0
    %709 = vmatpush2.bf16.msra.mxu0 %v606
    %710 = vmatprep.subr.bf16.mxu0 0
    %711 = vmatpush2.bf16.msra.mxu0 %v605
    %712 = vmatprep.subr.bf16.mxu0 0
    %713 = vmatpush2.bf16.msra.mxu0 %v604
    %714 = vmatprep.subr.bf16.mxu0 0
    %715 = vmatpush2.bf16.msra.mxu0 %v603
    %716 = vmatprep.mubr.bf16.mxu0 %v379
    %717 = vmatmul.mubr.bf16.gmra.mxu0 %v378
    %v718 = vpop.f32.mrf.mxu0
    %v719 = vadd.f32 %v678, %v718
    %v720 = vpop.f32.mrf.mxu0
    %v721 = vpop.f32.mrf.mxu0
    %v722 = vadd.f32 %v681, %v721
    %v723 = vpop.f32.mrf.mxu0
    %724 = vdwg.mxu0
    %725 = vst [vmem:[#allocation10] sm:$0xff] %v719
    %726 = vst [vmem:[#allocation10 + $0x8] sm:$0xff] %v722
    // Predicated region
    $region34: #{tpu_custom_call.1} parent=1 // pred_check
      _
    $region35: #{tpu_custom_call.1} parent=1 // pred_check_branch
      %728 = sbr.rel (0) target = $region37
    $region36: #{tpu_custom_call.1} parent=1 // pred_region
      %s730 = ssub.s32 256, 256
      %731 = vsyncadd [#allocation6], %s730
      %s732 = sshll.u32 [#allocation10], 4
      %s733 = int_to_ptr.vmem [resolvable:$true] %s732
      %738 = dma.vmem_to_hbm [thread:$0]  %s733, 256, %s6, [#allocation6], 128, 128, 8
    $region37: #{tpu_custom_call.1} parent=1 // pred_fallthru
      _
    // Predicated region
    $region38: #{tpu_custom_call.1} parent=1 // pred_check
      _
    $region39: #{tpu_custom_call.1} parent=1 // pred_check_branch
      %740 = sbr.rel (0) target = $region41
    $region40: #{tpu_custom_call.1} parent=1 // pred_region
      %741 = dma.done [#allocation6], 256
    $region41: #{tpu_custom_call.1} parent=1 // pred_fallthru
      _
    %742 = vsyncpa [#allocation5], 1
    %743 = vsyncpa [#allocation8], 1
    %744 = vsyncpa [#allocation6], 1

</llo_original>
